<compile_context>
chip_gen: v7x
topology: tpu7x:2x2x1
jax: 0.10.0
libtpu: 0.0.40
codegen_flags: <defaults>
</compile_context>

<pallas_src>
import functools

import jax
import jax.numpy as jnp
from jax.experimental import pallas as pl
from jax.experimental.pallas import tpu as pltpu


# ----------------------------------------------------------------------------
# Kernel: one fused matmul + bias add per batch tile, split into two outputs.
# ----------------------------------------------------------------------------
def hyperhead_kernel(x_ref, wf_ref, bf_ref, ow_ref, ob_ref, *, od, osz):
    # x_ref  : (TM, H)      batch tile on sublanes, hidden on lanes
    # wf_ref : (H, N)       fused [w-head | b-head] weights, N = od + osz (no pad)
    # bf_ref : (1, N)       fused biases
    # ow_ref : (TM, od)     lane-dense w-head output (od = O*D)
    # ob_ref : (TM, osz)    b-head output (full-extent last dim; tiny masked store)
    res = (
        jnp.dot(x_ref[...], wf_ref[...], preferred_element_type=jnp.float32)
        + bf_ref[...]
    )
    ow_ref[...] = res[:, :od].astype(ow_ref.dtype)
    ob_ref[...] = res[:, od:od + osz].astype(ob_ref.dtype)


# ----------------------------------------------------------------------------
# One-time parameter preparation (NOT per-forward): fuse + transpose.
# ----------------------------------------------------------------------------
def prepare_fused_params(ww, bw, wb, bb):
    """ww: (O*D, H); bw: (O*D,); wb: (O, H); bb: (O,).

    Returns (wf, bf) with wf: (H, N), bf: (1, N), N = O*D + O (no zero padding).
    Columns [0, O*D) are the w-head, [O*D, N) the b-head.
    """
    wf = jnp.concatenate(
        [ww.T.astype(jnp.float32), wb.T.astype(jnp.float32)], axis=1
    )
    bf = jnp.concatenate(
        [bw.astype(jnp.float32), bb.astype(jnp.float32)], axis=0
    )[None, :]
    return wf, bf


def _round_up(v, m):
    return ((v + m - 1) // m) * m


# ----------------------------------------------------------------------------
# Forward wrapper: batch-tiled pallas_call over the fused parameters.
# ----------------------------------------------------------------------------
def hyper_head_forward(x, wf, bf, output_size, base_inp_dim, *, use_pallas=None):
    """x: (B, H); wf: (H, N); bf: (1, N) with N = O*D + O.

    Returns (w, b) with shapes (B, O, D) and (B, O, 1), matching PyTorch.
    """
    B, H = x.shape
    OD = output_size * base_inp_dim
    O = output_size
    N = OD + O
    assert wf.shape == (H, N) and bf.shape == (1, N)

    if use_pallas is None:
        # Tiny batches are launch-overhead dominated: plain XLA on the fused
        # params is at least as fast as a pallas_call.
        use_pallas = B > 64

    if not use_pallas:
        res = x.astype(jnp.float32) @ wf + bf
        out_w, out_b = res[:, :OD], res[:, OD:N]
    else:
        # Batch tile selection:
        #   * B <= 64: single full-extent block (valid: block dim == array dim).
        #   * B  > 64: >= 2 grid steps (so v7x's second TensorCore participates),
        #     tile a multiple of 8 sublanes, capped at 2048 rows.  VMEM use at
        #     TM=2048: ~2.6 MB double-buffered (x + both outputs) + ~17 KB of
        #     resident weights -- far under the scoped VMEM limit on v5e/v6e/v7x.
        if B <= 64:
            TM = B
        else:
            TM = min(2048, _round_up(pl.cdiv(B, 2), 8))
        grid = (pl.cdiv(B, TM),)

        kernel = functools.partial(hyperhead_kernel, od=OD, osz=O)

        out_w, out_b = pl.pallas_call(
            kernel,
            out_shape=(
                jax.ShapeDtypeStruct((B, OD), jnp.float32),
                jax.ShapeDtypeStruct((B, O), jnp.float32),
            ),
            grid_spec=pltpu.PrefetchScalarGridSpec(
                num_scalar_prefetch=0,
                grid=grid,
                in_specs=[
                    pl.BlockSpec((TM, H), lambda i: (i, 0)),   # x tile
                    pl.BlockSpec((H, N), lambda i: (0, 0)),    # fused weights (resident)
                    pl.BlockSpec((1, N), lambda i: (0, 0)),    # fused bias (resident)
                ],
                out_specs=[
                    pl.BlockSpec((TM, OD), lambda i: (i, 0)),  # lane-dense w-head
                    pl.BlockSpec((TM, O), lambda i: (i, 0)),   # tiny b-head
                ],
            ),
            compiler_params=pltpu.CompilerParams(
                dimension_semantics=("parallel",),
            ),
            cost_estimate=pl.CostEstimate(
                flops=2 * B * H * N,
                transcendentals=0,
                bytes_accessed=4 * (B * H + H * N + N + B * N),
            ),
        )(x, wf, bf)

    # Module-facing views.  NOTE: downstream consumers that matmul over D are
    # better served by the lane-dense (B, O*D) slab; the (B, O, D)/(B, O, 1)
    # reshape is kept only to match the PyTorch return signature.
    w = out_w.reshape(B, output_size, base_inp_dim)
    b = out_b.reshape(B, output_size, 1)
    return w, b


# ----------------------------------------------------------------------------
# Deterministic orthogonal init (mirrors nn.init.orthogonal_ semantics).
# ----------------------------------------------------------------------------
def _orthogonal(key, out_dim, in_dim, gain):
    a = jax.random.normal(
        key, (max(out_dim, in_dim), min(out_dim, in_dim)), dtype=jnp.float32
    )
    q, r = jnp.linalg.qr(a)
    d = jnp.diag(r)
    q = q * jnp.where(d >= 0, 1.0, -1.0)[None, :]   # sign fix (never zero)
    if out_dim < in_dim:
        q = q.T
    return gain * q[:out_dim, :in_dim]


if __name__ == "__main__":
    # Small shapes consistent with the module.
    B = 2                  # batch
    meta_hidden_dim = 32
    base_inp_dim = 16
    output_size = 8
    stddev = 0.05

    key = jax.random.PRNGKey(0)
    kx, kw, kb, kx2 = jax.random.split(key, 4)

    x = jax.random.normal(kx, (B, meta_hidden_dim), dtype=jnp.float32)

    # Parameters: orthogonal weights scaled by stddev, zero biases
    # (deterministic, mirrors ortho_layer_init).
    ww = _orthogonal(kw, output_size * base_inp_dim, meta_hidden_dim, stddev)
    bw = jnp.zeros((output_size * base_inp_dim,), dtype=jnp.float32)
    wb = _orthogonal(kb, output_size, meta_hidden_dim, stddev)
    bb = jnp.zeros((output_size,), dtype=jnp.float32)

    # One-time fusion of the two heads' parameters.
    wf, bf = prepare_fused_params(ww, bw, wb, bb)

    # --- Small-batch run: force the Pallas path so the kernel is exercised. ---
    w_out, b_out = hyper_head_forward(
        x, wf, bf, output_size, base_inp_dim, use_pallas=True
    )
    jax.block_until_ready((w_out, b_out))

    w_ref = (x @ ww.T + bw).reshape(B, output_size, base_inp_dim)
    b_ref = (x @ wb.T + bb).reshape(B, output_size, 1)
    assert w_out.shape == (B, output_size, base_inp_dim)
    assert b_out.shape == (B, output_size, 1)
    assert jnp.allclose(w_out, w_ref, atol=1e-5)
    assert jnp.allclose(b_out, b_ref, atol=1e-5)

    # --- Larger batch: auto-dispatch uses a >= 2-step grid (multi-tile path). ---
    B2 = 512
    x2 = jax.random.normal(kx2, (B2, meta_hidden_dim), dtype=jnp.float32)
    w2, b2 = hyper_head_forward(x2, wf, bf, output_size, base_inp_dim)
    jax.block_until_ready((w2, b2))
    w2_ref = (x2 @ ww.T + bw).reshape(B2, output_size, base_inp_dim)
    b2_ref = (x2 @ wb.T + bb).reshape(B2, output_size, 1)
    assert jnp.allclose(w2, w2_ref, atol=1e-5)
    assert jnp.allclose(b2, b2_ref, atol=1e-5)

    print("KERNEL_OK")
</pallas_src>

<mosaic_0001>
module attributes {stable_mosaic.version = 11 : i64} {
  func.func @hyperhead_kernel(%arg0: i32, %arg1: memref<2x32xf32, #tpu.memory_space<vmem>>, %arg2: memref<32x136xf32, #tpu.memory_space<vmem>>, %arg3: memref<1x136xf32, #tpu.memory_space<vmem>>, %arg4: memref<2x128xf32, #tpu.memory_space<vmem>>, %arg5: memref<2x8xf32, #tpu.memory_space<vmem>>) attributes {dimension_semantics = [#tpu.dimension_semantics<parallel>], iteration_bounds = array<i64: 1>, scalar_prefetch = 0 : i64, scratch_operands = 0 : i64, tpu.core_type = #tpu.core_type<tc>, window_params = [{transform_indices = @transform_0, window_bounds = array<i64: 2, 32>}, {pipeline_mode = #tpu.pipeline_mode<synchronous>, transform_indices = @transform_1, window_bounds = array<i64: 32, 136>}, {pipeline_mode = #tpu.pipeline_mode<synchronous>, transform_indices = @transform_2, window_bounds = array<i64: 1, 136>}, {transform_indices = @transform_3, window_bounds = array<i64: 2, 128>}, {transform_indices = @transform_4, window_bounds = array<i64: 2, 8>}]} {
    %c0 = arith.constant 0 : index
    %c0_0 = arith.constant 0 : index
    %0 = vector.load %arg1[%c0, %c0_0] : memref<2x32xf32, #tpu.memory_space<vmem>>, vector<2x32xf32>
    %c0_1 = arith.constant 0 : index
    %c0_2 = arith.constant 0 : index
    %1 = vector.load %arg2[%c0_1, %c0_2] : memref<32x136xf32, #tpu.memory_space<vmem>>, vector<32x136xf32>
    %cst = arith.constant dense<0.000000e+00> : vector<2x136xf32>
    %2 = tpu.matmul %0, %1, %cst {dimension_numbers = #tpu.dot_dimension_numbers<[1], [0], [0], [1], [0, 0, 1, 1], [], []>} : vector<2x32xf32>, vector<32x136xf32>, vector<2x136xf32> -> vector<2x136xf32>
    %c0_3 = arith.constant 0 : index
    %c0_4 = arith.constant 0 : index
    %3 = vector.load %arg3[%c0_3, %c0_4] : memref<1x136xf32, #tpu.memory_space<vmem>>, vector<1x136xf32>
    %4 = vector.broadcast %3 : vector<1x136xf32> to vector<2x136xf32>
    %5 = arith.addf %2, %4 : vector<2x136xf32>
    %6 = vector.extract_strided_slice %5 {offsets = [0, 0], sizes = [2, 128], strides = [1, 1]} : vector<2x136xf32> to vector<2x128xf32>
    %c0_5 = arith.constant 0 : index
    %c0_6 = arith.constant 0 : index
    %7 = vector.load %arg4[%c0_5, %c0_6] : memref<2x128xf32, #tpu.memory_space<vmem>>, vector<2x128xf32>
    tpu.vector_store %arg4[%c0_5, %c0_6], %6 {strides = array<i32>} : memref<2x128xf32, #tpu.memory_space<vmem>>, vector<2x128xf32>,
    %8 = vector.extract_strided_slice %5 {offsets = [0, 128], sizes = [2, 8], strides = [1, 1]} : vector<2x136xf32> to vector<2x8xf32>
    %c0_7 = arith.constant 0 : index
    %c0_8 = arith.constant 0 : index
    %9 = vector.load %arg5[%c0_7, %c0_8] : memref<2x8xf32, #tpu.memory_space<vmem>>, vector<2x8xf32>
    tpu.vector_store %arg5[%c0_7, %c0_8], %8 {strides = array<i32>} : memref<2x8xf32, #tpu.memory_space<vmem>>, vector<2x8xf32>,
    return
  }
  func.func @transform_0(%arg0: i32) -> (i32, i32) {
    %c0_i32 = arith.constant 0 : i32
    %c0_i32_0 = arith.constant 0 : i32
    return %arg0, %c0_i32 : i32, i32
  }
  func.func @transform_1(%arg0: i32) -> (i32, i32) {
    %c0_i32 = arith.constant 0 : i32
    %c0_i32_0 = arith.constant 0 : i32
    %c0_i32_1 = arith.constant 0 : i32
    return %c0_i32, %c0_i32_0 : i32, i32
  }
  func.func @transform_2(%arg0: i32) -> (i32, i32) {
    %c0_i32 = arith.constant 0 : i32
    %c0_i32_0 = arith.constant 0 : i32
    %c0_i32_1 = arith.constant 0 : i32
    return %c0_i32, %c0_i32_0 : i32, i32
  }
  func.func @transform_3(%arg0: i32) -> (i32, i32) {
    %c0_i32 = arith.constant 0 : i32
    %c0_i32_0 = arith.constant 0 : i32
    return %arg0, %c0_i32 : i32, i32
  }
  func.func @transform_4(%arg0: i32) -> (i32, i32) {
    %c0_i32 = arith.constant 0 : i32
    %c0_i32_0 = arith.constant 0 : i32
    return %arg0, %c0_i32 : i32, i32
  }
}

</mosaic_0001>

<llo_original>
// kernel: tpu_custom_call.1
$region0: #{tpu_custom_call.1}
  #allocation0 [shape = 'u32[]', space=smem, size = 0x4, offset = 0x4, fixed_abs, tag = 'smem constant byte address 0x4 - core index']
  #allocation1 [shape = 'u32[144,128]{1,0:T(1,128)}', space=vmem, size = 0x12000, scoped, tag = 'internal scratch']
  %s0 = inlined_call_operand.hbm [shape: f32[2,32], index: 0, kind: input, shape index: {}]
  %s1 = inlined_call_operand.hbm [shape: f32[32,136], index: 1, kind: input, shape index: {}]
  %s2 = inlined_call_operand.vmem [shape: f32[1,136], index: 2, kind: input, shape index: {}]
  %s3 = inlined_call_operand.hbm [shape: f32[2,128], index: 3, kind: output, shape index: {0}]
  %s4 = inlined_call_operand.hbm [shape: f32[2,8], index: 4, kind: output, shape index: {1}]
  %5 = xla_tuple %s3, %s4
  %s6 = sld [smem:[#allocation0]]
  $region38: #{tpu_custom_call.1} parent=0
    _
  %s8 = ssub.s32 1, %s6
  %s9 = scalar_select 0, %s8, %s6
  $region1: #{tpu_custom_call.1} parent=0
    #allocation2 [shape = 'u8[1024]{0}', space=vmem, size = 0x400, scoped, tag = 'input window, operand 0, single buffered']
    #allocation3 [shape = 's32[1]{0}', space=sflag, size = 0x4, scoped, tag = 'scoped memory for tpu_custom_call.1']
    #allocation4 [shape = 's32[1]{0}', space=sflag, size = 0x4, scoped, tag = 'scoped memory for tpu_custom_call.1']
    #allocation5 [shape = 'u8[32768]{0}', space=vmem, size = 0x8000, scoped, tag = 'input window, operand 1, single buffered']
    #allocation6 [shape = 's32[1]{0}', space=sflag, size = 0x4, scoped, tag = 'scoped memory for tpu_custom_call.1']
    #allocation7 [shape = 'u8[1024]{0}', space=vmem, size = 0x400, scoped, tag = 'output window, operand 0, single buffered']
    #allocation8 [shape = 'u8[1024]{0}', space=vmem, size = 0x400, scoped, tag = 'output window, operand 1, single buffered']
    #allocation9 [shape = 's32[1]{0}', space=sflag, size = 0x4, scoped, tag = 'scoped memory for tpu_custom_call.1']
    %10 = vsyncpa [#allocation3], 0
    %11 = vsyncpa [#allocation6], 0
    %12 = vsyncpa [#allocation4], 0
    %13 = vsyncpa [#allocation9], 0
    // Predicated region
    $region2: #{tpu_custom_call.1} parent=1 // pred_check
      _
    $region3: #{tpu_custom_call.1} parent=1 // pred_check_branch
      %15 = sbr.rel (0) target = $region5
    $region4: #{tpu_custom_call.1} parent=1 // pred_region
      %s17 = ssub.s32 32, 32
      %18 = vsyncadd [#allocation3], %s17
      %s20 = sshll.u32 [#allocation2], 4
      %s21 = int_to_ptr.vmem [resolvable:$true] %s20
      %23 = dma.hbm_to_vmem [thread:$0]  %s0, 32, %s21, [#allocation3]
    $region5: #{tpu_custom_call.1} parent=1 // pred_fallthru
      _
    // Predicated region
    $region6: #{tpu_custom_call.1} parent=1 // pred_check
      _
    $region7: #{tpu_custom_call.1} parent=1 // pred_check_branch
      %25 = sbr.rel (0) target = $region9
    $region8: #{tpu_custom_call.1} parent=1 // pred_region
      %s27 = ssub.s32 1024, 1024
      %28 = vsyncadd [#allocation6], %s27
      %s29 = sshll.u32 [#allocation5], 4
      %s30 = int_to_ptr.vmem [resolvable:$true] %s29
      %35 = dma.hbm_to_vmem [thread:$0]  %s1, 1024, %s30, [#allocation6], 256, 256, 16
    $region9: #{tpu_custom_call.1} parent=1 // pred_fallthru
      _
    // Predicated region
    $region10: #{tpu_custom_call.1} parent=1 // pred_check
      _
    $region11: #{tpu_custom_call.1} parent=1 // pred_check_branch
      %37 = sbr.rel (0) target = $region13
    $region12: #{tpu_custom_call.1} parent=1 // pred_region
      _
    $region13: #{tpu_custom_call.1} parent=1 // pred_fallthru
      _
    // Predicated region
    $region14: #{tpu_custom_call.1} parent=1 // pred_check
      _
    $region15: #{tpu_custom_call.1} parent=1 // pred_check_branch
      %39 = sbr.rel (0) target = $region17
    $region16: #{tpu_custom_call.1} parent=1 // pred_region
      %40 = dma.done [#allocation3], 32
    $region17: #{tpu_custom_call.1} parent=1 // pred_fallthru
      _
    // Predicated region
    $region18: #{tpu_custom_call.1} parent=1 // pred_check
      _
    $region19: #{tpu_custom_call.1} parent=1 // pred_check_branch
      %42 = sbr.rel (0) target = $region21
    $region20: #{tpu_custom_call.1} parent=1 // pred_region
      %43 = dma.done [#allocation6], 1024
    $region21: #{tpu_custom_call.1} parent=1 // pred_fallthru
      _
    %v44 = vld [vmem:[#allocation2] sm:$0x3]
    %v45 = vld [vmem:[#allocation5] sm:$0xff]
    %v46 = vld [vmem:[#allocation5 + $0x8] sm:$0xff]
    %v47 = vld [vmem:[#allocation5 + $0x10] sm:$0xff]
    %v48 = vld [vmem:[#allocation5 + $0x18] sm:$0xff]
    %v49 = vld [vmem:[#allocation5 + $0x20] sm:$0xff]
    %v50 = vld [vmem:[#allocation5 + $0x28] sm:$0xff]
    %v51 = vld [vmem:[#allocation5 + $0x30] sm:$0xff]
    %v52 = vld [vmem:[#allocation5 + $0x38] sm:$0xff]
    %v53 = vld [vmem:[%s2] sm:$0x3]
    %v55 = vlaneseq
    %v56 = vshrl.u32 %v55, 7
    %v57 = vsub.s32 0, %v56
    %v58 = vrot.slane %v53, %v57
    %v59 = vlaneseq
    %v60 = vshrl.u32 %v59, 7
    %v61 = vsub.s32 1, %v60
    %v62 = vrot.slane %v53, %v61
    %vm65 = vcmask 261120
    %v67 = vsel %vm65, %v44, 0
    %69 = vmatprep.subr.mxu0 %v46
    %70 = vmatpush1.msra.mxu0 %v45
    %71 = vmatprep.subr.mxu0 %v48
    %72 = vmatpush1.msra.mxu0 %v47
    %73 = vmatprep.subr.mxu0 %v50
    %74 = vmatpush1.msra.mxu0 %v49
    %75 = vmatprep.subr.mxu0 %v52
    %76 = vmatpush1.msra.mxu0 %v51
    %77 = vmatprep.subr.mxu0 0.0
    %78 = vmatpush1.msra.mxu0 0.0
    %79 = vmatprep.subr.mxu0 0.0
    %80 = vmatpush1.msra.mxu0 0.0
    %81 = vmatprep.subr.mxu0 0.0
    %82 = vmatpush1.msra.mxu0 0.0
    %83 = vmatprep.subr.mxu0 0.0
    %84 = vmatpush1.msra.mxu0 0.0
    %85 = vmatprep.subr.mxu0 0.0
    %86 = vmatpush1.msra.mxu0 0.0
    %87 = vmatprep.subr.mxu0 0.0
    %88 = vmatpush1.msra.mxu0 0.0
    %89 = vmatprep.subr.mxu0 0.0
    %90 = vmatpush1.msra.mxu0 0.0
    %91 = vmatprep.subr.mxu0 0.0
    %92 = vmatpush1.msra.mxu0 0.0
    %93 = vmatprep.subr.mxu0 0.0
    %94 = vmatpush1.msra.mxu0 0.0
    %95 = vmatprep.subr.mxu0 0.0
    %96 = vmatpush1.msra.mxu0 0.0
    %97 = vmatprep.subr.mxu0 0.0
    %98 = vmatpush1.msra.mxu0 0.0
    %99 = vmatprep.subr.mxu0 0.0
    %100 = vmatpush1.msra.mxu0 0.0
    %101 = vmatprep.subr.mxu0 0.0
    %102 = vmatpush1.msra.mxu0 0.0
    %103 = vmatprep.subr.mxu0 0.0
    %104 = vmatpush1.msra.mxu0 0.0
    %105 = vmatprep.subr.mxu0 0.0
    %106 = vmatpush1.msra.mxu0 0.0
    %107 = vmatprep.subr.mxu0 0.0
    %108 = vmatpush1.msra.mxu0 0.0
    %109 = vmatprep.subr.mxu0 0.0
    %110 = vmatpush1.msra.mxu0 0.0
    %111 = vmatprep.subr.mxu0 0.0
    %112 = vmatpush1.msra.mxu0 0.0
    %113 = vmatprep.subr.mxu0 0.0
    %114 = vmatpush1.msra.mxu0 0.0
    %115 = vmatprep.subr.mxu0 0.0
    %116 = vmatpush1.msra.mxu0 0.0
    %117 = vmatprep.subr.mxu0 0.0
    %118 = vmatpush1.msra.mxu0 0.0
    %119 = vmatprep.subr.mxu0 0.0
    %120 = vmatpush1.msra.mxu0 0.0
    %121 = vmatprep.subr.mxu0 0.0
    %122 = vmatpush1.msra.mxu0 0.0
    %123 = vmatprep.subr.mxu0 0.0
    %124 = vmatpush1.msra.mxu0 0.0
    %125 = vmatprep.subr.mxu0 0.0
    %126 = vmatpush1.msra.mxu0 0.0
    %127 = vmatprep.subr.mxu0 0.0
    %128 = vmatpush1.msra.mxu0 0.0
    %129 = vmatprep.subr.mxu0 0.0
    %130 = vmatpush1.msra.mxu0 0.0
    %131 = vmatprep.subr.mxu0 0.0
    %132 = vmatpush1.msra.mxu0 0.0
    %133 = vmatprep.mubr.f32.mxu0 0.0
    %134 = vmatmul.mubr.f32.gmra.mrb[0].mxu0 %v67
    %v135 = vpop.f32.mrb[0].mxu0
    %v136 = vadd.f32 %v58, %v135
    %v137 = vpop.f32.mrb[0].mxu0
    %v138 = vadd.f32 %v62, %v137
    %139 = vdwg.mxu0
    %140 = vst [vmem:[#allocation7] sm:$0x3] %v136
    %vm141 = vcmask 58368
    %142 = vst.msk [vmem:[#allocation8] sm:$0x3] %vm141, %v138
    // Predicated region
    $region22: #{tpu_custom_call.1} parent=1 // pred_check
      _
    $region23: #{tpu_custom_call.1} parent=1 // pred_check_branch
      %144 = sbr.rel (0) target = $region25
    $region24: #{tpu_custom_call.1} parent=1 // pred_region
      %s146 = ssub.s32 32, 32
      %147 = vsyncadd [#allocation4], %s146
      %s149 = sshll.u32 [#allocation7], 4
      %s150 = int_to_ptr.vmem [resolvable:$true] %s149
      %152 = dma.vmem_to_hbm [thread:$0]  %s150, 32, %s3, [#allocation4]
    $region25: #{tpu_custom_call.1} parent=1 // pred_fallthru
      _
    // Predicated region
    $region26: #{tpu_custom_call.1} parent=1 // pred_check
      _
    $region27: #{tpu_custom_call.1} parent=1 // pred_check_branch
      %154 = sbr.rel (0) target = $region29
    $region28: #{tpu_custom_call.1} parent=1 // pred_region
      %s156 = ssub.s32 32, 32
      %157 = vsyncadd [#allocation9], %s156
      %s159 = sshll.u32 [#allocation8], 4
      %s160 = int_to_ptr.vmem [resolvable:$true] %s159
      %162 = dma.vmem_to_hbm [thread:$0]  %s160, 32, %s4, [#allocation9]
    $region29: #{tpu_custom_call.1} parent=1 // pred_fallthru
      _
    // Predicated region
    $region30: #{tpu_custom_call.1} parent=1 // pred_check
      _
    $region31: #{tpu_custom_call.1} parent=1 // pred_check_branch
      %164 = sbr.rel (0) target = $region33
    $region32: #{tpu_custom_call.1} parent=1 // pred_region
      %165 = dma.done [#allocation4], 32
    $region33: #{tpu_custom_call.1} parent=1 // pred_fallthru
      _
    // Predicated region
    $region34: #{tpu_custom_call.1} parent=1 // pred_check
      _
    $region35: #{tpu_custom_call.1} parent=1 // pred_check_branch
      %167 = sbr.rel (0) target = $region37
    $region36: #{tpu_custom_call.1} parent=1 // pred_region
      %168 = dma.done [#allocation9], 32
    $region37: #{tpu_custom_call.1} parent=1 // pred_fallthru
      _
    %169 = vsyncpa [#allocation3], 1
    %170 = vsyncpa [#allocation6], 1
    %171 = vsyncpa [#allocation4], 1
    %172 = vsyncpa [#allocation9], 1

</llo_original>
